<compile_context>
chip_gen: v5e
topology: v5e:2x2
jax: 0.10.0
libtpu: 0.0.40
codegen_flags: <defaults>
</compile_context>

<pallas_src>
import functools

import jax
import jax.numpy as jnp
from jax import lax
from jax.experimental import pallas as pl
from jax.experimental.pallas import tpu as pltpu

# --- model dims (small but lane/sublane aligned, consistent with the module) ---
VOCAB = 64
EMBED = 128      # EMBED_SIZE analogue
HIDDEN = 256     # HIDDEN_SIZE analogue
FC1 = 128
OUT = 2          # OUTPUT_DIM
OUT_PAD = 128    # lane-dense padded class dim for the kernel output
BATCH = 2
B_PAD = 8        # batch padded to the f32 (8, 128) sublane tile
SEQ = 8


def _rnn_kernel(x_ref, wih_ref, whh_ref, b_ref,
                w1_ref, b1_ref, w2_ref, b2_ref,
                out_ref, *, seq_len, batch):
    """Whole forward pass in one invocation.

    x_ref : (T*B_PAD, E) time-major flattened embedded input
    out_ref: (B_PAD, OUT_PAD) softmax probabilities (padded classes are 0)
    """
    # Hoisted input projection: one big matmul + fused (b_ih + b_hh) bias.
    xw = (jnp.dot(x_ref[...], wih_ref[...], preferred_element_type=jnp.float32)
          + b_ref[...])                                     # (T*B, H)

    w_hh = whh_ref[...]
    h = jnp.zeros((batch, w_hh.shape[0]), jnp.float32)

    # Fully unrolled recurrence (T is small and static); static sublane-aligned
    # slices of xw, so the per-step critical path is one vmatmul + tanh (EUP).
    for t in range(seq_len):
        h = jnp.tanh(xw[t * batch:(t + 1) * batch, :]
                     + jnp.dot(h, w_hh, preferred_element_type=jnp.float32))

    # Head: fc1 + ReLU -> fc2 (lane-padded to 128 classes) -> softmax.
    f = jnp.maximum(
        jnp.dot(h, w1_ref[...], preferred_element_type=jnp.float32) + b1_ref[...],
        0.0)
    logits = (jnp.dot(f, w2_ref[...], preferred_element_type=jnp.float32)
              + b2_ref[...])                                # (B_PAD, OUT_PAD)
    m = jnp.max(logits, axis=1, keepdims=True)
    e = jnp.exp(logits - m)                                 # padded classes -> exactly 0
    out_ref[...] = e / jnp.sum(e, axis=1, keepdims=True)    # exact div (keeps 1e-5 tol)


def sentiment_rnn_forward(token_ids, params):
    """token_ids: int32 (B, T). Returns softmax probabilities (B, OUT)."""
    B, T = token_ids.shape
    assert B <= B_PAD

    # --- JAX glue: embedding gather, batch padding, time-major flatten ---
    ids_pad = jnp.zeros((B_PAD, T), jnp.int32).at[:B].set(token_ids)
    x_emb = params["embed"][ids_pad]                        # (B_PAD, T, E)
    x_flat = jnp.transpose(x_emb, (1, 0, 2)).reshape(T * B_PAD, EMBED)

    # Fuse the two RNN biases.
    bias = params["b_ih"] + params["b_hh"]                  # (1, H)

    # Lane-pad fc2 to 128 output classes: zero weights, -1e30 bias on padded
    # classes => exp underflows to exactly 0 in the softmax.
    fc2_w_pad = jnp.zeros((FC1, OUT_PAD), jnp.float32).at[:, :OUT].set(params["fc2_w"])
    fc2_b_pad = jnp.full((1, OUT_PAD), -1e30, jnp.float32).at[:, :OUT].set(params["fc2_b"])

    full = lambda shape: pl.BlockSpec(shape, lambda i: tuple(0 for _ in shape))

    kernel = functools.partial(_rnn_kernel, seq_len=T, batch=B_PAD)

    probs_pad = pl.pallas_call(
        kernel,
        out_shape=jax.ShapeDtypeStruct((B_PAD, OUT_PAD), jnp.float32),
        grid_spec=pltpu.PrefetchScalarGridSpec(
            num_scalar_prefetch=0,
            grid=(1,),                      # single invocation; recurrence is in-kernel
            in_specs=[
                full((T * B_PAD, EMBED)),   # x (time-major, flattened)
                full((EMBED, HIDDEN)),      # w_ih
                full((HIDDEN, HIDDEN)),     # w_hh
                full((1, HIDDEN)),          # fused bias
                full((HIDDEN, FC1)),        # fc1 W
                full((1, FC1)),             # fc1 b
                full((FC1, OUT_PAD)),       # fc2 W (lane-padded)
                full((1, OUT_PAD)),         # fc2 b (lane-padded)
            ],
            out_specs=pl.BlockSpec((B_PAD, OUT_PAD), lambda i: (0, 0)),
        ),
        compiler_params=pltpu.CompilerParams(
            dimension_semantics=("arbitrary",)),
    )(x_flat, params["w_ih"], params["w_hh"], bias,
      params["fc1_w"], params["fc1_b"], fc2_w_pad, fc2_b_pad)

    return probs_pad[:B, :OUT]


def init_params(key):
    ks = jax.random.split(key, 9)

    def u(k, shape, scale):
        return jax.random.uniform(k, shape, jnp.float32, -scale, scale)

    sh = 1.0 / jnp.sqrt(HIDDEN)
    s1 = 1.0 / jnp.sqrt(HIDDEN)
    s2 = 1.0 / jnp.sqrt(FC1)
    return {
        "embed": jax.random.normal(ks[0], (VOCAB, EMBED), jnp.float32),
        # stored as (in, out) = transpose of PyTorch's (out, in)
        "w_ih": u(ks[1], (EMBED, HIDDEN), sh),
        "w_hh": u(ks[2], (HIDDEN, HIDDEN), sh),
        "b_ih": u(ks[3], (1, HIDDEN), sh),
        "b_hh": u(ks[4], (1, HIDDEN), sh),
        "fc1_w": u(ks[5], (HIDDEN, FC1), s1),
        "fc1_b": u(ks[6], (1, FC1), s1),
        "fc2_w": u(ks[7], (FC1, OUT), s2),
        "fc2_b": u(ks[8], (1, OUT), s2),
    }


def _reference_forward(token_ids, params):
    """Pure-JAX reference of the PyTorch forward (for a sanity check)."""
    x = params["embed"][token_ids]                          # (B, T, E)
    B, T, _ = x.shape
    h = jnp.zeros((B, HIDDEN), jnp.float32)

    def step(h, x_t):
        h = jnp.tanh(x_t @ params["w_ih"] + params["b_ih"]
                     + h @ params["w_hh"] + params["b_hh"])
        return h, None

    h, _ = lax.scan(step, h, jnp.transpose(x, (1, 0, 2)))
    f = jnp.maximum(h @ params["fc1_w"] + params["fc1_b"], 0.0)
    logits = f @ params["fc2_w"] + params["fc2_b"]
    return jax.nn.softmax(logits, axis=1)


if __name__ == "__main__":
    key = jax.random.PRNGKey(0)
    pkey, xkey = jax.random.split(key)
    params = init_params(pkey)
    token_ids = jax.random.randint(xkey, (BATCH, SEQ), 0, VOCAB, dtype=jnp.int32)

    probs = sentiment_rnn_forward(token_ids, params)
    probs = jax.block_until_ready(probs)

    ref = _reference_forward(token_ids, params)
    assert probs.shape == (BATCH, OUT)
    assert jnp.allclose(probs, ref, atol=1e-5, rtol=1e-5), (probs, ref)
    print("KERNEL_OK")
</pallas_src>

<mosaic_0001>
module attributes {stable_mosaic.version = 11 : i64} {
  func.func @_rnn_kernel(%arg0: i32, %arg1: memref<64x128xf32, #tpu.memory_space<vmem>>, %arg2: memref<128x256xf32, #tpu.memory_space<vmem>>, %arg3: memref<256x256xf32, #tpu.memory_space<vmem>>, %arg4: memref<1x256xf32, #tpu.memory_space<vmem>>, %arg5: memref<256x128xf32, #tpu.memory_space<vmem>>, %arg6: memref<1x128xf32, #tpu.memory_space<vmem>>, %arg7: memref<128x128xf32, #tpu.memory_space<vmem>>, %arg8: memref<1x128xf32, #tpu.memory_space<vmem>>, %arg9: memref<8x128xf32, #tpu.memory_space<vmem>>) attributes {dimension_semantics = [#tpu.dimension_semantics<arbitrary>], iteration_bounds = array<i64: 1>, scalar_prefetch = 0 : i64, scratch_operands = 0 : i64, tpu.core_type = #tpu.core_type<tc>, window_params = [{pipeline_mode = #tpu.pipeline_mode<synchronous>, transform_indices = @transform_0, window_bounds = array<i64: 64, 128>}, {pipeline_mode = #tpu.pipeline_mode<synchronous>, transform_indices = @transform_1, window_bounds = array<i64: 128, 256>}, {pipeline_mode = #tpu.pipeline_mode<synchronous>, transform_indices = @transform_2, window_bounds = array<i64: 256, 256>}, {pipeline_mode = #tpu.pipeline_mode<synchronous>, transform_indices = @transform_3, window_bounds = array<i64: 1, 256>}, {pipeline_mode = #tpu.pipeline_mode<synchronous>, transform_indices = @transform_4, window_bounds = array<i64: 256, 128>}, {pipeline_mode = #tpu.pipeline_mode<synchronous>, transform_indices = @transform_5, window_bounds = array<i64: 1, 128>}, {pipeline_mode = #tpu.pipeline_mode<synchronous>, transform_indices = @transform_6, window_bounds = array<i64: 128, 128>}, {pipeline_mode = #tpu.pipeline_mode<synchronous>, transform_indices = @transform_7, window_bounds = array<i64: 1, 128>}, {pipeline_mode = #tpu.pipeline_mode<synchronous>, transform_indices = @transform_8, window_bounds = array<i64: 8, 128>}]} {
    %c0 = arith.constant 0 : index
    %c0_0 = arith.constant 0 : index
    %0 = vector.load %arg1[%c0, %c0_0] : memref<64x128xf32, #tpu.memory_space<vmem>>, vector<64x128xf32>
    %c0_1 = arith.constant 0 : index
    %c0_2 = arith.constant 0 : index
    %1 = vector.load %arg2[%c0_1, %c0_2] : memref<128x256xf32, #tpu.memory_space<vmem>>, vector<128x256xf32>
    %cst = arith.constant dense<0.000000e+00> : vector<64x256xf32>
    %2 = tpu.matmul %0, %1, %cst {dimension_numbers = #tpu.dot_dimension_numbers<[1], [0], [0], [1], [0, 0, 1, 1], [], []>} : vector<64x128xf32>, vector<128x256xf32>, vector<64x256xf32> -> vector<64x256xf32>
    %c0_3 = arith.constant 0 : index
    %c0_4 = arith.constant 0 : index
    %3 = vector.load %arg4[%c0_3, %c0_4] : memref<1x256xf32, #tpu.memory_space<vmem>>, vector<1x256xf32>
    %4 = vector.broadcast %3 : vector<1x256xf32> to vector<64x256xf32>
    %5 = arith.addf %2, %4 : vector<64x256xf32>
    %c0_5 = arith.constant 0 : index
    %c0_6 = arith.constant 0 : index
    %6 = vector.load %arg3[%c0_5, %c0_6] : memref<256x256xf32, #tpu.memory_space<vmem>>, vector<256x256xf32>
    %cst_7 = arith.constant 0.000000e+00 : f32
    %7 = vector.broadcast %cst_7 : f32 to vector<8x256xf32>
    %8 = vector.extract_strided_slice %5 {offsets = [0, 0], sizes = [8, 256], strides = [1, 1]} : vector<64x256xf32> to vector<8x256xf32>
    %cst_8 = arith.constant dense<0.000000e+00> : vector<8x256xf32>
    %9 = tpu.matmul %7, %6, %cst_8 {dimension_numbers = #tpu.dot_dimension_numbers<[1], [0], [0], [1], [0, 0, 1, 1], [], []>} : vector<8x256xf32>, vector<256x256xf32>, vector<8x256xf32> -> vector<8x256xf32>
    %10 = arith.addf %8, %9 : vector<8x256xf32>
    %11 = math.tanh %10 : vector<8x256xf32>
    %12 = vector.extract_strided_slice %5 {offsets = [8, 0], sizes = [8, 256], strides = [1, 1]} : vector<64x256xf32> to vector<8x256xf32>
    %cst_9 = arith.constant dense<0.000000e+00> : vector<8x256xf32>
    %13 = tpu.matmul %11, %6, %cst_9 {dimension_numbers = #tpu.dot_dimension_numbers<[1], [0], [0], [1], [0, 0, 1, 1], [], []>} : vector<8x256xf32>, vector<256x256xf32>, vector<8x256xf32> -> vector<8x256xf32>
    %14 = arith.addf %12, %13 : vector<8x256xf32>
    %15 = math.tanh %14 : vector<8x256xf32>
    %16 = vector.extract_strided_slice %5 {offsets = [16, 0], sizes = [8, 256], strides = [1, 1]} : vector<64x256xf32> to vector<8x256xf32>
    %cst_10 = arith.constant dense<0.000000e+00> : vector<8x256xf32>
    %17 = tpu.matmul %15, %6, %cst_10 {dimension_numbers = #tpu.dot_dimension_numbers<[1], [0], [0], [1], [0, 0, 1, 1], [], []>} : vector<8x256xf32>, vector<256x256xf32>, vector<8x256xf32> -> vector<8x256xf32>
    %18 = arith.addf %16, %17 : vector<8x256xf32>
    %19 = math.tanh %18 : vector<8x256xf32>
    %20 = vector.extract_strided_slice %5 {offsets = [24, 0], sizes = [8, 256], strides = [1, 1]} : vector<64x256xf32> to vector<8x256xf32>
    %cst_11 = arith.constant dense<0.000000e+00> : vector<8x256xf32>
    %21 = tpu.matmul %19, %6, %cst_11 {dimension_numbers = #tpu.dot_dimension_numbers<[1], [0], [0], [1], [0, 0, 1, 1], [], []>} : vector<8x256xf32>, vector<256x256xf32>, vector<8x256xf32> -> vector<8x256xf32>
    %22 = arith.addf %20, %21 : vector<8x256xf32>
    %23 = math.tanh %22 : vector<8x256xf32>
    %24 = vector.extract_strided_slice %5 {offsets = [32, 0], sizes = [8, 256], strides = [1, 1]} : vector<64x256xf32> to vector<8x256xf32>
    %cst_12 = arith.constant dense<0.000000e+00> : vector<8x256xf32>
    %25 = tpu.matmul %23, %6, %cst_12 {dimension_numbers = #tpu.dot_dimension_numbers<[1], [0], [0], [1], [0, 0, 1, 1], [], []>} : vector<8x256xf32>, vector<256x256xf32>, vector<8x256xf32> -> vector<8x256xf32>
    %26 = arith.addf %24, %25 : vector<8x256xf32>
    %27 = math.tanh %26 : vector<8x256xf32>
    %28 = vector.extract_strided_slice %5 {offsets = [40, 0], sizes = [8, 256], strides = [1, 1]} : vector<64x256xf32> to vector<8x256xf32>
    %cst_13 = arith.constant dense<0.000000e+00> : vector<8x256xf32>
    %29 = tpu.matmul %27, %6, %cst_13 {dimension_numbers = #tpu.dot_dimension_numbers<[1], [0], [0], [1], [0, 0, 1, 1], [], []>} : vector<8x256xf32>, vector<256x256xf32>, vector<8x256xf32> -> vector<8x256xf32>
    %30 = arith.addf %28, %29 : vector<8x256xf32>
    %31 = math.tanh %30 : vector<8x256xf32>
    %32 = vector.extract_strided_slice %5 {offsets = [48, 0], sizes = [8, 256], strides = [1, 1]} : vector<64x256xf32> to vector<8x256xf32>
    %cst_14 = arith.constant dense<0.000000e+00> : vector<8x256xf32>
    %33 = tpu.matmul %31, %6, %cst_14 {dimension_numbers = #tpu.dot_dimension_numbers<[1], [0], [0], [1], [0, 0, 1, 1], [], []>} : vector<8x256xf32>, vector<256x256xf32>, vector<8x256xf32> -> vector<8x256xf32>
    %34 = arith.addf %32, %33 : vector<8x256xf32>
    %35 = math.tanh %34 : vector<8x256xf32>
    %36 = vector.extract_strided_slice %5 {offsets = [56, 0], sizes = [8, 256], strides = [1, 1]} : vector<64x256xf32> to vector<8x256xf32>
    %cst_15 = arith.constant dense<0.000000e+00> : vector<8x256xf32>
    %37 = tpu.matmul %35, %6, %cst_15 {dimension_numbers = #tpu.dot_dimension_numbers<[1], [0], [0], [1], [0, 0, 1, 1], [], []>} : vector<8x256xf32>, vector<256x256xf32>, vector<8x256xf32> -> vector<8x256xf32>
    %38 = arith.addf %36, %37 : vector<8x256xf32>
    %39 = math.tanh %38 : vector<8x256xf32>
    %c0_16 = arith.constant 0 : index
    %c0_17 = arith.constant 0 : index
    %40 = vector.load %arg5[%c0_16, %c0_17] : memref<256x128xf32, #tpu.memory_space<vmem>>, vector<256x128xf32>
    %cst_18 = arith.constant dense<0.000000e+00> : vector<8x128xf32>
    %41 = tpu.matmul %39, %40, %cst_18 {dimension_numbers = #tpu.dot_dimension_numbers<[1], [0], [0], [1], [0, 0, 1, 1], [], []>} : vector<8x256xf32>, vector<256x128xf32>, vector<8x128xf32> -> vector<8x128xf32>
    %c0_19 = arith.constant 0 : index
    %c0_20 = arith.constant 0 : index
    %42 = vector.load %arg6[%c0_19, %c0_20] : memref<1x128xf32, #tpu.memory_space<vmem>>, vector<1x128xf32>
    %43 = vector.broadcast %42 : vector<1x128xf32> to vector<8x128xf32>
    %44 = arith.addf %41, %43 : vector<8x128xf32>
    %cst_21 = arith.constant 0.000000e+00 : f32
    %45 = vector.broadcast %cst_21 : f32 to vector<8x128xf32>
    %46 = arith.maximumf %44, %45 : vector<8x128xf32>
    %c0_22 = arith.constant 0 : index
    %c0_23 = arith.constant 0 : index
    %47 = vector.load %arg7[%c0_22, %c0_23] : memref<128x128xf32, #tpu.memory_space<vmem>>, vector<128x128xf32>
    %cst_24 = arith.constant dense<0.000000e+00> : vector<8x128xf32>
    %48 = tpu.matmul %46, %47, %cst_24 {dimension_numbers = #tpu.dot_dimension_numbers<[1], [0], [0], [1], [0, 0, 1, 1], [], []>} : vector<8x128xf32>, vector<128x128xf32>, vector<8x128xf32> -> vector<8x128xf32>
    %c0_25 = arith.constant 0 : index
    %c0_26 = arith.constant 0 : index
    %49 = vector.load %arg8[%c0_25, %c0_26] : memref<1x128xf32, #tpu.memory_space<vmem>>, vector<1x128xf32>
    %50 = vector.broadcast %49 : vector<1x128xf32> to vector<8x128xf32>
    %51 = arith.addf %48, %50 : vector<8x128xf32>
    %cst_27 = arith.constant dense<0xFF800000> : vector<8xf32>
    %52 = vector.multi_reduction <maximumf>, %51, %cst_27 [1] : vector<8x128xf32> to vector<8xf32>
    %53 = vector.shape_cast %52 : vector<8xf32> to vector<8x1xf32>
    %54 = vector.broadcast %53 : vector<8x1xf32> to vector<8x128xf32>
    %55 = arith.subf %51, %54 : vector<8x128xf32>
    %56 = math.exp %55 : vector<8x128xf32>
    %cst_28 = arith.constant dense<0.000000e+00> : vector<8xf32>
    %57 = vector.multi_reduction <add>, %56, %cst_28 [1] : vector<8x128xf32> to vector<8xf32>
    %58 = vector.shape_cast %57 : vector<8xf32> to vector<8x1xf32>
    %59 = vector.broadcast %58 : vector<8x1xf32> to vector<8x128xf32>
    %60 = arith.divf %56, %59 : vector<8x128xf32>
    %c0_29 = arith.constant 0 : index
    %c0_30 = arith.constant 0 : index
    %61 = vector.load %arg9[%c0_29, %c0_30] : memref<8x128xf32, #tpu.memory_space<vmem>>, vector<8x128xf32>
    tpu.vector_store %arg9[%c0_29, %c0_30], %60 {strides = array<i32>} : memref<8x128xf32, #tpu.memory_space<vmem>>, vector<8x128xf32>,
    return
  }
  func.func @transform_0(%arg0: i32) -> (i32, i32) {
    %c0_i32 = arith.constant 0 : i32
    %c0_i32_0 = arith.constant 0 : i32
    %c0_i32_1 = arith.constant 0 : i32
    return %c0_i32, %c0_i32_0 : i32, i32
  }
  func.func @transform_1(%arg0: i32) -> (i32, i32) {
    %c0_i32 = arith.constant 0 : i32
    %c0_i32_0 = arith.constant 0 : i32
    %c0_i32_1 = arith.constant 0 : i32
    return %c0_i32, %c0_i32_0 : i32, i32
  }
  func.func @transform_2(%arg0: i32) -> (i32, i32) {
    %c0_i32 = arith.constant 0 : i32
    %c0_i32_0 = arith.constant 0 : i32
    %c0_i32_1 = arith.constant 0 : i32
    return %c0_i32, %c0_i32_0 : i32, i32
  }
  func.func @transform_3(%arg0: i32) -> (i32, i32) {
    %c0_i32 = arith.constant 0 : i32
    %c0_i32_0 = arith.constant 0 : i32
    %c0_i32_1 = arith.constant 0 : i32
    return %c0_i32, %c0_i32_0 : i32, i32
  }
  func.func @transform_4(%arg0: i32) -> (i32, i32) {
    %c0_i32 = arith.constant 0 : i32
    %c0_i32_0 = arith.constant 0 : i32
    %c0_i32_1 = arith.constant 0 : i32
    return %c0_i32, %c0_i32_0 : i32, i32
  }
  func.func @transform_5(%arg0: i32) -> (i32, i32) {
    %c0_i32 = arith.constant 0 : i32
    %c0_i32_0 = arith.constant 0 : i32
    %c0_i32_1 = arith.constant 0 : i32
    return %c0_i32, %c0_i32_0 : i32, i32
  }
  func.func @transform_6(%arg0: i32) -> (i32, i32) {
    %c0_i32 = arith.constant 0 : i32
    %c0_i32_0 = arith.constant 0 : i32
    %c0_i32_1 = arith.constant 0 : i32
    return %c0_i32, %c0_i32_0 : i32, i32
  }
  func.func @transform_7(%arg0: i32) -> (i32, i32) {
    %c0_i32 = arith.constant 0 : i32
    %c0_i32_0 = arith.constant 0 : i32
    %c0_i32_1 = arith.constant 0 : i32
    return %c0_i32, %c0_i32_0 : i32, i32
  }
  func.func @transform_8(%arg0: i32) -> (i32, i32) {
    %c0_i32 = arith.constant 0 : i32
    %c0_i32_0 = arith.constant 0 : i32
    %c0_i32_1 = arith.constant 0 : i32
    return %c0_i32, %c0_i32_0 : i32, i32
  }
}

</mosaic_0001>

<llo_original>
// kernel: tpu_custom_call.1
$region0: #{tpu_custom_call.1}
  #allocation0 [shape = 'u32[]', space=smem, size = 0x4, offset = 0x4, fixed_abs, tag = 'smem constant byte address 0x4 - core index']
  #allocation1 [shape = 'u32[72,128]{1,0:T(1,128)}', space=vmem, size = 0x9000, scoped, tag = 'internal scratch']
  %s0 = inlined_call_operand.hbm [shape: f32[64,128], index: 0, kind: input, shape index: {}]
  %s1 = inlined_call_operand.hbm [shape: f32[128,256], index: 1, kind: input, shape index: {}]
  %s2 = inlined_call_operand.hbm [shape: f32[256,256], index: 2, kind: input, shape index: {}]
  %s3 = inlined_call_operand.vmem [shape: f32[1,256], index: 3, kind: input, shape index: {}]
  %s4 = inlined_call_operand.hbm [shape: f32[256,128], index: 4, kind: input, shape index: {}]
  %s5 = inlined_call_operand.vmem [shape: f32[1,128], index: 5, kind: input, shape index: {}]
  %s6 = inlined_call_operand.hbm [shape: f32[128,128], index: 6, kind: input, shape index: {}]
  %s7 = inlined_call_operand.vmem [shape: f32[1,128], index: 7, kind: input, shape index: {}]
  %s8 = inlined_call_operand.hbm [shape: f32[8,128], index: 8, kind: output, shape index: {}]
  %s9 = sld [smem:[#allocation0]]
  $region62: #{tpu_custom_call.1} parent=0
    _
  %s11 = ssub.s32 1, %s9
  %s12 = scalar_select 0, %s11, %s9
  $region1: #{tpu_custom_call.1} parent=0
    #allocation2 [shape = 'u8[32768]{0}', space=vmem, size = 0x8000, scoped, tag = 'input window, operand 0, single buffered']
    #allocation3 [shape = 's32[1]{0}', space=sflag, size = 0x4, scoped, tag = 'scoped memory for tpu_custom_call.1']
    #allocation4 [shape = 's32[1]{0}', space=sflag, size = 0x4, scoped, tag = 'scoped memory for tpu_custom_call.1']
    #allocation5 [shape = 'u8[131072]{0}', space=vmem, size = 0x20000, scoped, tag = 'input window, operand 1, single buffered']
    #allocation6 [shape = 's32[1]{0}', space=sflag, size = 0x4, scoped, tag = 'scoped memory for tpu_custom_call.1']
    #allocation7 [shape = 'u8[262144]{0}', space=vmem, size = 0x40000, scoped, tag = 'input window, operand 2, single buffered']
    #allocation8 [shape = 'u8[131072]{0}', space=vmem, size = 0x20000, scoped, tag = 'input window, operand 4, single buffered']
    #allocation9 [shape = 's32[1]{0}', space=sflag, size = 0x4, scoped, tag = 'scoped memory for tpu_custom_call.1']
    #allocation10 [shape = 'u8[65536]{0}', space=vmem, size = 0x10000, scoped, tag = 'input window, operand 6, single buffered']
    #allocation11 [shape = 'u8[4096]{0}', space=vmem, size = 0x1000, scoped, tag = 'output window, operand 0, single buffered']
    %13 = vsyncpa [#allocation3], 0
    %14 = vsyncpa [#allocation6], 0
    %15 = vsyncpa [#allocation9], 0
    %16 = vsyncpa [#allocation4], 0
    // Predicated region
    $region2: #{tpu_custom_call.1} parent=1 // pred_check
      _
    $region3: #{tpu_custom_call.1} parent=1 // pred_check_branch
      %18 = sbr.rel (0) target = $region5
    $region4: #{tpu_custom_call.1} parent=1 // pred_region
      %20 = vsyncadd [#allocation3], 0
      %s21 = sshll.u32 %s0, 4
      %s22 = int_to_ptr.hbm [resolvable:$true] %s21
      %s23 = sshll.u32 [#allocation2], 4
      %s24 = int_to_ptr.vmem [resolvable:$true] %s23
      %29 = dma.hbm_to_vmem [thread:$0]  %s22, 1024, %s24, [#allocation3], 128, 128, 8
    $region5: #{tpu_custom_call.1} parent=1 // pred_fallthru
      _
    // Predicated region
    $region6: #{tpu_custom_call.1} parent=1 // pred_check
      _
    $region7: #{tpu_custom_call.1} parent=1 // pred_check_branch
      %31 = sbr.rel (0) target = $region9
    $region8: #{tpu_custom_call.1} parent=1 // pred_region
      %33 = vsyncadd [#allocation6], 0
      %s34 = sshll.u32 %s1, 4
      %s35 = int_to_ptr.hbm [resolvable:$true] %s34
      %s36 = sshll.u32 [#allocation5], 4
      %s37 = int_to_ptr.vmem [resolvable:$true] %s36
      %42 = dma.hbm_to_vmem [thread:$0]  %s35, 4096, %s37, [#allocation6], 256, 256, 16
    $region9: #{tpu_custom_call.1} parent=1 // pred_fallthru
      _
    // Predicated region
    $region10: #{tpu_custom_call.1} parent=1 // pred_check
      _
    $region11: #{tpu_custom_call.1} parent=1 // pred_check_branch
      %44 = sbr.rel (0) target = $region13
    $region12: #{tpu_custom_call.1} parent=1 // pred_region
      %46 = vsyncadd [#allocation6], 0
      %s47 = sshll.u32 %s2, 4
      %s48 = int_to_ptr.hbm [resolvable:$true] %s47
      %s49 = sshll.u32 [#allocation7], 4
      %s50 = int_to_ptr.vmem [resolvable:$true] %s49
      %55 = dma.hbm_to_vmem [thread:$0]  %s48, 8192, %s50, [#allocation6], 256, 256, 16
    $region13: #{tpu_custom_call.1} parent=1 // pred_fallthru
      _
    // Predicated region
    $region14: #{tpu_custom_call.1} parent=1 // pred_check
      _
    $region15: #{tpu_custom_call.1} parent=1 // pred_check_branch
      %57 = sbr.rel (0) target = $region17
    $region16: #{tpu_custom_call.1} parent=1 // pred_region
      _
    $region17: #{tpu_custom_call.1} parent=1 // pred_fallthru
      _
    // Predicated region
    $region18: #{tpu_custom_call.1} parent=1 // pred_check
      _
    $region19: #{tpu_custom_call.1} parent=1 // pred_check_branch
      %59 = sbr.rel (0) target = $region21
    $region20: #{tpu_custom_call.1} parent=1 // pred_region
      %61 = vsyncadd [#allocation9], 0
      %s62 = sshll.u32 %s4, 4
      %s63 = int_to_ptr.hbm [resolvable:$true] %s62
      %s64 = sshll.u32 [#allocation8], 4
      %s65 = int_to_ptr.vmem [resolvable:$true] %s64
      %70 = dma.hbm_to_vmem [thread:$0]  %s63, 4096, %s65, [#allocation9], 128, 128, 8
    $region21: #{tpu_custom_call.1} parent=1 // pred_fallthru
      _
    // Predicated region
    $region22: #{tpu_custom_call.1} parent=1 // pred_check
      _
    $region23: #{tpu_custom_call.1} parent=1 // pred_check_branch
      %72 = sbr.rel (0) target = $region25
    $region24: #{tpu_custom_call.1} parent=1 // pred_region
      _
    $region25: #{tpu_custom_call.1} parent=1 // pred_fallthru
      _
    // Predicated region
    $region26: #{tpu_custom_call.1} parent=1 // pred_check
      _
    $region27: #{tpu_custom_call.1} parent=1 // pred_check_branch
      %74 = sbr.rel (0) target = $region29
    $region28: #{tpu_custom_call.1} parent=1 // pred_region
      %76 = vsyncadd [#allocation9], 0
      %s77 = sshll.u32 %s6, 4
      %s78 = int_to_ptr.hbm [resolvable:$true] %s77
      %s79 = sshll.u32 [#allocation10], 4
      %s80 = int_to_ptr.vmem [resolvable:$true] %s79
      %85 = dma.hbm_to_vmem [thread:$0]  %s78, 2048, %s80, [#allocation9], 128, 128, 8
    $region29: #{tpu_custom_call.1} parent=1 // pred_fallthru
      _
    // Predicated region
    $region30: #{tpu_custom_call.1} parent=1 // pred_check
      _
    $region31: #{tpu_custom_call.1} parent=1 // pred_check_branch
      %87 = sbr.rel (0) target = $region33
    $region32: #{tpu_custom_call.1} parent=1 // pred_region
      _
    $region33: #{tpu_custom_call.1} parent=1 // pred_fallthru
      _
    // Predicated region
    $region34: #{tpu_custom_call.1} parent=1 // pred_check
      _
    $region35: #{tpu_custom_call.1} parent=1 // pred_check_branch
      %89 = sbr.rel (0) target = $region37
    $region36: #{tpu_custom_call.1} parent=1 // pred_region
      %91 = dma.done [#allocation3], 1024
    $region37: #{tpu_custom_call.1} parent=1 // pred_fallthru
      _
    // Predicated region
    $region38: #{tpu_custom_call.1} parent=1 // pred_check
      _
    $region39: #{tpu_custom_call.1} parent=1 // pred_check_branch
      %93 = sbr.rel (0) target = $region41
    $region40: #{tpu_custom_call.1} parent=1 // pred_region
      %95 = dma.done [#allocation6], 4096
    $region41: #{tpu_custom_call.1} parent=1 // pred_fallthru
      _
    // Predicated region
    $region42: #{tpu_custom_call.1} parent=1 // pred_check
      _
    $region43: #{tpu_custom_call.1} parent=1 // pred_check_branch
      %97 = sbr.rel (0) target = $region45
    $region44: #{tpu_custom_call.1} parent=1 // pred_region
      %99 = dma.done [#allocation6], 8192
    $region45: #{tpu_custom_call.1} parent=1 // pred_fallthru
      _
    // Predicated region
    $region46: #{tpu_custom_call.1} parent=1 // pred_check
      _
    $region47: #{tpu_custom_call.1} parent=1 // pred_check_branch
      %101 = sbr.rel (0) target = $region49
    $region48: #{tpu_custom_call.1} parent=1 // pred_region
      %103 = dma.done [#allocation9], 4096
    $region49: #{tpu_custom_call.1} parent=1 // pred_fallthru
      _
    // Predicated region
    $region50: #{tpu_custom_call.1} parent=1 // pred_check
      _
    $region51: #{tpu_custom_call.1} parent=1 // pred_check_branch
      %105 = sbr.rel (0) target = $region53
    $region52: #{tpu_custom_call.1} parent=1 // pred_region
      %107 = dma.done [#allocation9], 2048
    $region53: #{tpu_custom_call.1} parent=1 // pred_fallthru
      _
    %v108 = vld [vmem:[#allocation2] sm:$0xff]
    %v109 = vld [vmem:[#allocation2 + $0x8] sm:$0xff]
    %v110 = vld [vmem:[#allocation2 + $0x10] sm:$0xff]
    %v111 = vld [vmem:[#allocation2 + $0x18] sm:$0xff]
    %v112 = vld [vmem:[#allocation2 + $0x20] sm:$0xff]
    %v113 = vld [vmem:[#allocation2 + $0x28] sm:$0xff]
    %v114 = vld [vmem:[#allocation2 + $0x30] sm:$0xff]
    %v115 = vld [vmem:[#allocation2 + $0x38] sm:$0xff]
    %v116 = vld [vmem:[#allocation5] sm:$0xff]
    %v117 = vld [vmem:[#allocation5 + $0x8] sm:$0xff]
    %v118 = vld [vmem:[#allocation5 + $0x10] sm:$0xff]
    %v119 = vld [vmem:[#allocation5 + $0x18] sm:$0xff]
    %v120 = vld [vmem:[#allocation5 + $0x20] sm:$0xff]
    %v121 = vld [vmem:[#allocation5 + $0x28] sm:$0xff]
    %v122 = vld [vmem:[#allocation5 + $0x30] sm:$0xff]
    %v123 = vld [vmem:[#allocation5 + $0x38] sm:$0xff]
    %v124 = vld [vmem:[#allocation5 + $0x40] sm:$0xff]
    %v125 = vld [vmem:[#allocation5 + $0x48] sm:$0xff]
    %v126 = vld [vmem:[#allocation5 + $0x50] sm:$0xff]
    %v127 = vld [vmem:[#allocation5 + $0x58] sm:$0xff]
    %v128 = vld [vmem:[#allocation5 + $0x60] sm:$0xff]
    %v129 = vld [vmem:[#allocation5 + $0x68] sm:$0xff]
    %v130 = vld [vmem:[#allocation5 + $0x70] sm:$0xff]
    %v131 = vld [vmem:[#allocation5 + $0x78] sm:$0xff]
    %v132 = vld [vmem:[#allocation5 + $0x80] sm:$0xff]
    %v133 = vld [vmem:[#allocation5 + $0x88] sm:$0xff]
    %v134 = vld [vmem:[#allocation5 + $0x90] sm:$0xff]
    %v135 = vld [vmem:[#allocation5 + $0x98] sm:$0xff]
    %v136 = vld [vmem:[#allocation5 + $0xa0] sm:$0xff]
    %v137 = vld [vmem:[#allocation5 + $0xa8] sm:$0xff]
    %v138 = vld [vmem:[#allocation5 + $0xb0] sm:$0xff]
    %v139 = vld [vmem:[#allocation5 + $0xb8] sm:$0xff]
    %v140 = vld [vmem:[#allocation5 + $0xc0] sm:$0xff]
    %v141 = vld [vmem:[#allocation5 + $0xc8] sm:$0xff]
    %v142 = vld [vmem:[#allocation5 + $0xd0] sm:$0xff]
    %v143 = vld [vmem:[#allocation5 + $0xd8] sm:$0xff]
    %v144 = vld [vmem:[#allocation5 + $0xe0] sm:$0xff]
    %v145 = vld [vmem:[#allocation5 + $0xe8] sm:$0xff]
    %v146 = vld [vmem:[#allocation5 + $0xf0] sm:$0xff]
    %v147 = vld [vmem:[#allocation5 + $0xf8] sm:$0xff]
    %v148 = vld [vmem:[%s3] sm:$0x3]
    %v150 = vperm.slane %v148, 0
    %v151 = vperm.slane %v148, 1
    %154 = vmatpush.msra.mxu0 %v146
    %155 = vmatpush.msra.mxu0 %v144
    %156 = vmatpush.msra.mxu0 %v142
    %157 = vmatpush.msra.mxu0 %v140
    %158 = vmatpush.msra.mxu0 %v138
    %159 = vmatpush.msra.mxu0 %v136
    %160 = vmatpush.msra.mxu0 %v134
    %161 = vmatpush.msra.mxu0 %v132
    %162 = vmatpush.msra.mxu0 %v130
    %163 = vmatpush.msra.mxu0 %v128
    %164 = vmatpush.msra.mxu0 %v126
    %165 = vmatpush.msra.mxu0 %v124
    %166 = vmatpush.msra.mxu0 %v122
    %167 = vmatpush.msra.mxu0 %v120
    %168 = vmatpush.msra.mxu0 %v118
    %169 = vmatpush.msra.mxu0 %v116
    %170 = vmatmul.f32.gmra.mxu0 %v108
    %v171 = vpop.f32.mrf.mxu0
    %v172 = vadd.f32 %v150, %v171
    %173 = vmatmul.f32.gmra.mxu0 %v109
    %v174 = vpop.f32.mrf.mxu0
    %v175 = vadd.f32 %v150, %v174
    %176 = vmatmul.f32.gmra.mxu0 %v110
    %v177 = vpop.f32.mrf.mxu0
    %v178 = vadd.f32 %v150, %v177
    %179 = vmatmul.f32.gmra.mxu0 %v111
    %v180 = vpop.f32.mrf.mxu0
    %v181 = vadd.f32 %v150, %v180
    %182 = vmatmul.f32.gmra.mxu0 %v112
    %v183 = vpop.f32.mrf.mxu0
    %v184 = vadd.f32 %v150, %v183
    %185 = vmatmul.f32.gmra.mxu0 %v113
    %v186 = vpop.f32.mrf.mxu0
    %v187 = vadd.f32 %v150, %v186
    %188 = vmatmul.f32.gmra.mxu0 %v114
    %v189 = vpop.f32.mrf.mxu0
    %v190 = vadd.f32 %v150, %v189
    %191 = vmatmul.f32.gmra.mxu0 %v115
    %v192 = vpop.f32.mrf.mxu0
    %v193 = vadd.f32 %v150, %v192
    %194 = vdwg.mxu0
    %195 = vmatpush.msra.mxu0 %v147
    %196 = vmatpush.msra.mxu0 %v145
    %197 = vmatpush.msra.mxu0 %v143
    %198 = vmatpush.msra.mxu0 %v141
    %199 = vmatpush.msra.mxu0 %v139
    %200 = vmatpush.msra.mxu0 %v137
    %201 = vmatpush.msra.mxu0 %v135
    %202 = vmatpush.msra.mxu0 %v133
    %203 = vmatpush.msra.mxu0 %v131
    %204 = vmatpush.msra.mxu0 %v129
    %205 = vmatpush.msra.mxu0 %v127
    %206 = vmatpush.msra.mxu0 %v125
    %207 = vmatpush.msra.mxu0 %v123
    %208 = vmatpush.msra.mxu0 %v121
    %209 = vmatpush.msra.mxu0 %v119
    %210 = vmatpush.msra.mxu0 %v117
    %211 = vmatmul.f32.gmra.mxu0 %v108
    %v212 = vpop.f32.mrf.mxu0
    %v213 = vadd.f32 %v151, %v212
    %214 = vmatmul.f32.gmra.mxu0 %v109
    %v215 = vpop.f32.mrf.mxu0
    %v216 = vadd.f32 %v151, %v215
    %217 = vmatmul.f32.gmra.mxu0 %v110
    %v218 = vpop.f32.mrf.mxu0
    %v219 = vadd.f32 %v151, %v218
    %220 = vmatmul.f32.gmra.mxu0 %v111
    %v221 = vpop.f32.mrf.mxu0
    %v222 = vadd.f32 %v151, %v221
    %223 = vmatmul.f32.gmra.mxu0 %v112
    %v224 = vpop.f32.mrf.mxu0
    %v225 = vadd.f32 %v151, %v224
    %226 = vmatmul.f32.gmra.mxu0 %v113
    %v227 = vpop.f32.mrf.mxu0
    %v228 = vadd.f32 %v151, %v227
    %229 = vmatmul.f32.gmra.mxu0 %v114
    %v230 = vpop.f32.mrf.mxu0
    %v231 = vadd.f32 %v151, %v230
    %232 = vmatmul.f32.gmra.mxu0 %v115
    %v233 = vpop.f32.mrf.mxu0
    %v234 = vadd.f32 %v151, %v233
    %235 = vdwg.mxu0
    %v236 = vld [vmem:[#allocation7] sm:$0xff]
    %v237 = vld [vmem:[#allocation7 + $0x8] sm:$0xff]
    %v238 = vld [vmem:[#allocation7 + $0x10] sm:$0xff]
    %v239 = vld [vmem:[#allocation7 + $0x18] sm:$0xff]
    %v240 = vld [vmem:[#allocation7 + $0x20] sm:$0xff]
    %v241 = vld [vmem:[#allocation7 + $0x28] sm:$0xff]
    %v242 = vld [vmem:[#allocation7 + $0x30] sm:$0xff]
    %v243 = vld [vmem:[#allocation7 + $0x38] sm:$0xff]
    %v244 = vld [vmem:[#allocation7 + $0x40] sm:$0xff]
    %v245 = vld [vmem:[#allocation7 + $0x48] sm:$0xff]
    %v246 = vld [vmem:[#allocation7 + $0x50] sm:$0xff]
    %v247 = vld [vmem:[#allocation7 + $0x58] sm:$0xff]
    %v248 = vld [vmem:[#allocation7 + $0x60] sm:$0xff]
    %v249 = vld [vmem:[#allocation7 + $0x68] sm:$0xff]
    %v250 = vld [vmem:[#allocation7 + $0x70] sm:$0xff]
    %v251 = vld [vmem:[#allocation7 + $0x78] sm:$0xff]
    %v252 = vld [vmem:[#allocation7 + $0x80] sm:$0xff]
    %v253 = vld [vmem:[#allocation7 + $0x88] sm:$0xff]
    %v254 = vld [vmem:[#allocation7 + $0x90] sm:$0xff]
    %v255 = vld [vmem:[#allocation7 + $0x98] sm:$0xff]
    %v256 = vld [vmem:[#allocation7 + $0xa0] sm:$0xff]
    %v257 = vld [vmem:[#allocation7 + $0xa8] sm:$0xff]
    %v258 = vld [vmem:[#allocation7 + $0xb0] sm:$0xff]
    %v259 = vld [vmem:[#allocation7 + $0xb8] sm:$0xff]
    %v260 = vld [vmem:[#allocation7 + $0xc0] sm:$0xff]
    %v261 = vld [vmem:[#allocation7 + $0xc8] sm:$0xff]
    %v262 = vld [vmem:[#allocation7 + $0xd0] sm:$0xff]
    %v263 = vld [vmem:[#allocation7 + $0xd8] sm:$0xff]
    %v264 = vld [vmem:[#allocation7 + $0xe0] sm:$0xff]
    %v265 = vld [vmem:[#allocation7 + $0xe8] sm:$0xff]
    %v266 = vld [vmem:[#allocation7 + $0xf0] sm:$0xff]
    %v267 = vld [vmem:[#allocation7 + $0xf8] sm:$0xff]
    %v268 = vld [vmem:[#allocation7 + $0x100] sm:$0xff]
    %v269 = vld [vmem:[#allocation7 + $0x108] sm:$0xff]
    %v270 = vld [vmem:[#allocation7 + $0x110] sm:$0xff]
    %v271 = vld [vmem:[#allocation7 + $0x118] sm:$0xff]
    %v272 = vld [vmem:[#allocation7 + $0x120] sm:$0xff]
    %v273 = vld [vmem:[#allocation7 + $0x128] sm:$0xff]
    %v274 = vld [vmem:[#allocation7 + $0x130] sm:$0xff]
    %v275 = vld [vmem:[#allocation7 + $0x138] sm:$0xff]
    %v276 = vld [vmem:[#allocation7 + $0x140] sm:$0xff]
    %v277 = vld [vmem:[#allocation7 + $0x148] sm:$0xff]
    %v278 = vld [vmem:[#allocation7 + $0x150] sm:$0xff]
    %v279 = vld [vmem:[#allocation7 + $0x158] sm:$0xff]
    %v280 = vld [vmem:[#allocation7 + $0x160] sm:$0xff]
    %v281 = vld [vmem:[#allocation7 + $0x168] sm:$0xff]
    %v282 = vld [vmem:[#allocation7 + $0x170] sm:$0xff]
    %v283 = vld [vmem:[#allocation7 + $0x178] sm:$0xff]
    %v284 = vld [vmem:[#allocation7 + $0x180] sm:$0xff]
    %v285 = vld [vmem:[#allocation7 + $0x188] sm:$0xff]
    %v286 = vld [vmem:[#allocation7 + $0x190] sm:$0xff]
    %v287 = vld [vmem:[#allocation7 + $0x198] sm:$0xff]
    %v288 = vld [vmem:[#allocation7 + $0x1a0] sm:$0xff]
    %v289 = vld [vmem:[#allocation7 + $0x1a8] sm:$0xff]
    %v290 = vld [vmem:[#allocation7 + $0x1b0] sm:$0xff]
    %v291 = vld [vmem:[#allocation7 + $0x1b8] sm:$0xff]
    %v292 = vld [vmem:[#allocation7 + $0x1c0] sm:$0xff]
    %v293 = vld [vmem:[#allocation7 + $0x1c8] sm:$0xff]
    %v294 = vld [vmem:[#allocation7 + $0x1d0] sm:$0xff]
    %v295 = vld [vmem:[#allocation7 + $0x1d8] sm:$0xff]
    %v296 = vld [vmem:[#allocation7 + $0x1e0] sm:$0xff]
    %v297 = vld [vmem:[#allocation7 + $0x1e8] sm:$0xff]
    %v298 = vld [vmem:[#allocation7 + $0x1f0] sm:$0xff]
    %v299 = vld [vmem:[#allocation7 + $0x1f8] sm:$0xff]
    %300 = vmatpush.msra.mxu0 %v266
    %301 = vmatpush.msra.mxu0 %v264
    %302 = vmatpush.msra.mxu0 %v262
    %303 = vmatpush.msra.mxu0 %v260
    %304 = vmatpush.msra.mxu0 %v258
    %305 = vmatpush.msra.mxu0 %v256
    %306 = vmatpush.msra.mxu0 %v254
    %307 = vmatpush.msra.mxu0 %v252
    %308 = vmatpush.msra.mxu0 %v250
    %309 = vmatpush.msra.mxu0 %v248
    %310 = vmatpush.msra.mxu0 %v246
    %311 = vmatpush.msra.mxu0 %v244
    %312 = vmatpush.msra.mxu0 %v242
    %313 = vmatpush.msra.mxu0 %v240
    %314 = vmatpush.msra.mxu0 %v238
    %315 = vmatpush.msra.mxu0 %v236
    %316 = vmatmul.f32.gmra.mxu0 0.0
    %v317 = vpop.f32.mrf.mxu0
    %v318 = vadd.f32 0.0, %v317
    %319 = vdwg.mxu0
    %320 = vmatpush.msra.mxu0 %v298
    %321 = vmatpush.msra.mxu0 %v296
    %322 = vmatpush.msra.mxu0 %v294
    %323 = vmatpush.msra.mxu0 %v292
    %324 = vmatpush.msra.mxu0 %v290
    %325 = vmatpush.msra.mxu0 %v288
    %326 = vmatpush.msra.mxu0 %v286
    %327 = vmatpush.msra.mxu0 %v284
    %328 = vmatpush.msra.mxu0 %v282
    %329 = vmatpush.msra.mxu0 %v280
    %330 = vmatpush.msra.mxu0 %v278
    %331 = vmatpush.msra.mxu0 %v276
    %332 = vmatpush.msra.mxu0 %v274
    %333 = vmatpush.msra.mxu0 %v272
    %334 = vmatpush.msra.mxu0 %v270
    %335 = vmatpush.msra.mxu0 %v268
    %336 = vmatmul.f32.gmra.mxu0 0.0
    %v337 = vpop.f32.mrf.mxu0
    %v338 = vadd.f32 %v318, %v337
    %339 = vdwg.mxu0
    %340 = vmatpush.msra.mxu0 %v267
    %341 = vmatpush.msra.mxu0 %v265
    %342 = vmatpush.msra.mxu0 %v263
    %343 = vmatpush.msra.mxu0 %v261
    %344 = vmatpush.msra.mxu0 %v259
    %345 = vmatpush.msra.mxu0 %v257
    %346 = vmatpush.msra.mxu0 %v255
    %347 = vmatpush.msra.mxu0 %v253
    %348 = vmatpush.msra.mxu0 %v251
    %349 = vmatpush.msra.mxu0 %v249
    %350 = vmatpush.msra.mxu0 %v247
    %351 = vmatpush.msra.mxu0 %v245
    %352 = vmatpush.msra.mxu0 %v243
    %353 = vmatpush.msra.mxu0 %v241
    %354 = vmatpush.msra.mxu0 %v239
    %355 = vmatpush.msra.mxu0 %v237
    %356 = vmatmul.f32.gmra.mxu0 0.0
    %v357 = vpop.f32.mrf.mxu0
    %v358 = vadd.f32 0.0, %v357
    %359 = vdwg.mxu0
    %360 = vmatpush.msra.mxu0 %v299
    %361 = vmatpush.msra.mxu0 %v297
    %362 = vmatpush.msra.mxu0 %v295
    %363 = vmatpush.msra.mxu0 %v293
    %364 = vmatpush.msra.mxu0 %v291
    %365 = vmatpush.msra.mxu0 %v289
    %366 = vmatpush.msra.mxu0 %v287
    %367 = vmatpush.msra.mxu0 %v285
    %368 = vmatpush.msra.mxu0 %v283
    %369 = vmatpush.msra.mxu0 %v281
    %370 = vmatpush.msra.mxu0 %v279
    %371 = vmatpush.msra.mxu0 %v277
    %372 = vmatpush.msra.mxu0 %v275
    %373 = vmatpush.msra.mxu0 %v273
    %374 = vmatpush.msra.mxu0 %v271
    %375 = vmatpush.msra.mxu0 %v269
    %376 = vmatmul.f32.gmra.mxu0 0.0
    %v377 = vpop.f32.mrf.mxu0
    %v378 = vadd.f32 %v358, %v377
    %379 = vdwg.mxu0
    %v380 = vadd.f32 %v172, %v338
    %v381 = vadd.f32 %v213, %v378
    %v382 = vtanh.pop %v380
    %v383 = vtanh.pop %v381
    %384 = vmatpush.msra.mxu0 %v266
    %385 = vmatpush.msra.mxu0 %v264
    %386 = vmatpush.msra.mxu0 %v262
    %387 = vmatpush.msra.mxu0 %v260
    %388 = vmatpush.msra.mxu0 %v258
    %389 = vmatpush.msra.mxu0 %v256
    %390 = vmatpush.msra.mxu0 %v254
    %391 = vmatpush.msra.mxu0 %v252
    %392 = vmatpush.msra.mxu0 %v250
    %393 = vmatpush.msra.mxu0 %v248
    %394 = vmatpush.msra.mxu0 %v246
    %395 = vmatpush.msra.mxu0 %v244
    %396 = vmatpush.msra.mxu0 %v242
    %397 = vmatpush.msra.mxu0 %v240
    %398 = vmatpush.msra.mxu0 %v238
    %399 = vmatpush.msra.mxu0 %v236
    %400 = vmatmul.f32.gmra.mxu0 %v382
    %v401 = vpop.f32.mrf.mxu0
    %v402 = vadd.f32 0.0, %v401
    %403 = vdwg.mxu0
    %404 = vmatpush.msra.mxu0 %v298
    %405 = vmatpush.msra.mxu0 %v296
    %406 = vmatpush.msra.mxu0 %v294
    %407 = vmatpush.msra.mxu0 %v292
    %408 = vmatpush.msra.mxu0 %v290
    %409 = vmatpush.msra.mxu0 %v288
    %410 = vmatpush.msra.mxu0 %v286
    %411 = vmatpush.msra.mxu0 %v284
    %412 = vmatpush.msra.mxu0 %v282
    %413 = vmatpush.msra.mxu0 %v280
    %414 = vmatpush.msra.mxu0 %v278
    %415 = vmatpush.msra.mxu0 %v276
    %416 = vmatpush.msra.mxu0 %v274
    %417 = vmatpush.msra.mxu0 %v272
    %418 = vmatpush.msra.mxu0 %v270
    %419 = vmatpush.msra.mxu0 %v268
    %420 = vmatmul.f32.gmra.mxu0 %v383
    %v421 = vpop.f32.mrf.mxu0
    %v422 = vadd.f32 %v402, %v421
    %423 = vdwg.mxu0
    %424 = vmatpush.msra.mxu0 %v267
    %425 = vmatpush.msra.mxu0 %v265
    %426 = vmatpush.msra.mxu0 %v263
    %427 = vmatpush.msra.mxu0 %v261
    %428 = vmatpush.msra.mxu0 %v259
    %429 = vmatpush.msra.mxu0 %v257
    %430 = vmatpush.msra.mxu0 %v255
    %431 = vmatpush.msra.mxu0 %v253
    %432 = vmatpush.msra.mxu0 %v251
    %433 = vmatpush.msra.mxu0 %v249
    %434 = vmatpush.msra.mxu0 %v247
    %435 = vmatpush.msra.mxu0 %v245
    %436 = vmatpush.msra.mxu0 %v243
    %437 = vmatpush.msra.mxu0 %v241
    %438 = vmatpush.msra.mxu0 %v239
    %439 = vmatpush.msra.mxu0 %v237
    %440 = vmatmul.f32.gmra.mxu0 %v382
    %v441 = vpop.f32.mrf.mxu0
    %v442 = vadd.f32 0.0, %v441
    %443 = vdwg.mxu0
    %444 = vmatpush.msra.mxu0 %v299
    %445 = vmatpush.msra.mxu0 %v297
    %446 = vmatpush.msra.mxu0 %v295
    %447 = vmatpush.msra.mxu0 %v293
    %448 = vmatpush.msra.mxu0 %v291
    %449 = vmatpush.msra.mxu0 %v289
    %450 = vmatpush.msra.mxu0 %v287
    %451 = vmatpush.msra.mxu0 %v285
    %452 = vmatpush.msra.mxu0 %v283
    %453 = vmatpush.msra.mxu0 %v281
    %454 = vmatpush.msra.mxu0 %v279
    %455 = vmatpush.msra.mxu0 %v277
    %456 = vmatpush.msra.mxu0 %v275
    %457 = vmatpush.msra.mxu0 %v273
    %458 = vmatpush.msra.mxu0 %v271
    %459 = vmatpush.msra.mxu0 %v269
    %460 = vmatmul.f32.gmra.mxu0 %v383
    %v461 = vpop.f32.mrf.mxu0
    %v462 = vadd.f32 %v442, %v461
    %463 = vdwg.mxu0
    %v464 = vadd.f32 %v175, %v422
    %v465 = vadd.f32 %v216, %v462
    %v466 = vtanh.pop %v464
    %v467 = vtanh.pop %v465
    %468 = vmatpush.msra.mxu0 %v266
    %469 = vmatpush.msra.mxu0 %v264
    %470 = vmatpush.msra.mxu0 %v262
    %471 = vmatpush.msra.mxu0 %v260
    %472 = vmatpush.msra.mxu0 %v258
    %473 = vmatpush.msra.mxu0 %v256
    %474 = vmatpush.msra.mxu0 %v254
    %475 = vmatpush.msra.mxu0 %v252
    %476 = vmatpush.msra.mxu0 %v250
    %477 = vmatpush.msra.mxu0 %v248
    %478 = vmatpush.msra.mxu0 %v246
    %479 = vmatpush.msra.mxu0 %v244
    %480 = vmatpush.msra.mxu0 %v242
    %481 = vmatpush.msra.mxu0 %v240
    %482 = vmatpush.msra.mxu0 %v238
    %483 = vmatpush.msra.mxu0 %v236
    %484 = vmatmul.f32.gmra.mxu0 %v466
    %v485 = vpop.f32.mrf.mxu0
    %v486 = vadd.f32 0.0, %v485
    %487 = vdwg.mxu0
    %488 = vmatpush.msra.mxu0 %v298
    %489 = vmatpush.msra.mxu0 %v296
    %490 = vmatpush.msra.mxu0 %v294
    %491 = vmatpush.msra.mxu0 %v292
    %492 = vmatpush.msra.mxu0 %v290
    %493 = vmatpush.msra.mxu0 %v288
    %494 = vmatpush.msra.mxu0 %v286
    %495 = vmatpush.msra.mxu0 %v284
    %496 = vmatpush.msra.mxu0 %v282
    %497 = vmatpush.msra.mxu0 %v280
    %498 = vmatpush.msra.mxu0 %v278
    %499 = vmatpush.msra.mxu0 %v276
    %500 = vmatpush.msra.mxu0 %v274
    %501 = vmatpush.msra.mxu0 %v272
    %502 = vmatpush.msra.mxu0 %v270
    %503 = vmatpush.msra.mxu0 %v268
    %504 = vmatmul.f32.gmra.mxu0 %v467
    %v505 = vpop.f32.mrf.mxu0
    %v506 = vadd.f32 %v486, %v505
    %507 = vdwg.mxu0
    %508 = vmatpush.msra.mxu0 %v267
    %509 = vmatpush.msra.mxu0 %v265
    %510 = vmatpush.msra.mxu0 %v263
    %511 = vmatpush.msra.mxu0 %v261
    %512 = vmatpush.msra.mxu0 %v259
    %513 = vmatpush.msra.mxu0 %v257
    %514 = vmatpush.msra.mxu0 %v255
    %515 = vmatpush.msra.mxu0 %v253
    %516 = vmatpush.msra.mxu0 %v251
    %517 = vmatpush.msra.mxu0 %v249
    %518 = vmatpush.msra.mxu0 %v247
    %519 = vmatpush.msra.mxu0 %v245
    %520 = vmatpush.msra.mxu0 %v243
    %521 = vmatpush.msra.mxu0 %v241
    %522 = vmatpush.msra.mxu0 %v239
    %523 = vmatpush.msra.mxu0 %v237
    %524 = vmatmul.f32.gmra.mxu0 %v466
    %v525 = vpop.f32.mrf.mxu0
    %v526 = vadd.f32 0.0, %v525
    %527 = vdwg.mxu0
    %528 = vmatpush.msra.mxu0 %v299
    %529 = vmatpush.msra.mxu0 %v297
    %530 = vmatpush.msra.mxu0 %v295
    %531 = vmatpush.msra.mxu0 %v293
    %532 = vmatpush.msra.mxu0 %v291
    %533 = vmatpush.msra.mxu0 %v289
    %534 = vmatpush.msra.mxu0 %v287
    %535 = vmatpush.msra.mxu0 %v285
    %536 = vmatpush.msra.mxu0 %v283
    %537 = vmatpush.msra.mxu0 %v281
    %538 = vmatpush.msra.mxu0 %v279
    %539 = vmatpush.msra.mxu0 %v277
    %540 = vmatpush.msra.mxu0 %v275
    %541 = vmatpush.msra.mxu0 %v273
    %542 = vmatpush.msra.mxu0 %v271
    %543 = vmatpush.msra.mxu0 %v269
    %544 = vmatmul.f32.gmra.mxu0 %v467
    %v545 = vpop.f32.mrf.mxu0
    %v546 = vadd.f32 %v526, %v545
    %547 = vdwg.mxu0
    %v548 = vadd.f32 %v178, %v506
    %v549 = vadd.f32 %v219, %v546
    %v550 = vtanh.pop %v548
    %v551 = vtanh.pop %v549
    %552 = vmatpush.msra.mxu0 %v266
    %553 = vmatpush.msra.mxu0 %v264
    %554 = vmatpush.msra.mxu0 %v262
    %555 = vmatpush.msra.mxu0 %v260
    %556 = vmatpush.msra.mxu0 %v258
    %557 = vmatpush.msra.mxu0 %v256
    %558 = vmatpush.msra.mxu0 %v254
    %559 = vmatpush.msra.mxu0 %v252
    %560 = vmatpush.msra.mxu0 %v250
    %561 = vmatpush.msra.mxu0 %v248
    %562 = vmatpush.msra.mxu0 %v246
    %563 = vmatpush.msra.mxu0 %v244
    %564 = vmatpush.msra.mxu0 %v242
    %565 = vmatpush.msra.mxu0 %v240
    %566 = vmatpush.msra.mxu0 %v238
    %567 = vmatpush.msra.mxu0 %v236
    %568 = vmatmul.f32.gmra.mxu0 %v550
    %v569 = vpop.f32.mrf.mxu0
    %v570 = vadd.f32 0.0, %v569
    %571 = vdwg.mxu0
    %572 = vmatpush.msra.mxu0 %v298
    %573 = vmatpush.msra.mxu0 %v296
    %574 = vmatpush.msra.mxu0 %v294
    %575 = vmatpush.msra.mxu0 %v292
    %576 = vmatpush.msra.mxu0 %v290
    %577 = vmatpush.msra.mxu0 %v288
    %578 = vmatpush.msra.mxu0 %v286
    %579 = vmatpush.msra.mxu0 %v284
    %580 = vmatpush.msra.mxu0 %v282
    %581 = vmatpush.msra.mxu0 %v280
    %582 = vmatpush.msra.mxu0 %v278
    %583 = vmatpush.msra.mxu0 %v276
    %584 = vmatpush.msra.mxu0 %v274
    %585 = vmatpush.msra.mxu0 %v272
    %586 = vmatpush.msra.mxu0 %v270
    %587 = vmatpush.msra.mxu0 %v268
    %588 = vmatmul.f32.gmra.mxu0 %v551
    %v589 = vpop.f32.mrf.mxu0
    %v590 = vadd.f32 %v570, %v589
    %591 = vdwg.mxu0
    %592 = vmatpush.msra.mxu0 %v267
    %593 = vmatpush.msra.mxu0 %v265
    %594 = vmatpush.msra.mxu0 %v263
    %595 = vmatpush.msra.mxu0 %v261
    %596 = vmatpush.msra.mxu0 %v259
    %597 = vmatpush.msra.mxu0 %v257
    %598 = vmatpush.msra.mxu0 %v255
    %599 = vmatpush.msra.mxu0 %v253
    %600 = vmatpush.msra.mxu0 %v251
    %601 = vmatpush.msra.mxu0 %v249
    %602 = vmatpush.msra.mxu0 %v247
    %603 = vmatpush.msra.mxu0 %v245
    %604 = vmatpush.msra.mxu0 %v243
    %605 = vmatpush.msra.mxu0 %v241
    %606 = vmatpush.msra.mxu0 %v239
    %607 = vmatpush.msra.mxu0 %v237
    %608 = vmatmul.f32.gmra.mxu0 %v550
    %v609 = vpop.f32.mrf.mxu0
    %v610 = vadd.f32 0.0, %v609
    %611 = vdwg.mxu0
    %612 = vmatpush.msra.mxu0 %v299
    %613 = vmatpush.msra.mxu0 %v297
    %614 = vmatpush.msra.mxu0 %v295
    %615 = vmatpush.msra.mxu0 %v293
    %616 = vmatpush.msra.mxu0 %v291
    %617 = vmatpush.msra.mxu0 %v289
    %618 = vmatpush.msra.mxu0 %v287
    %619 = vmatpush.msra.mxu0 %v285
    %620 = vmatpush.msra.mxu0 %v283
    %621 = vmatpush.msra.mxu0 %v281
    %622 = vmatpush.msra.mxu0 %v279
    %623 = vmatpush.msra.mxu0 %v277
    %624 = vmatpush.msra.mxu0 %v275
    %625 = vmatpush.msra.mxu0 %v273
    %626 = vmatpush.msra.mxu0 %v271
    %627 = vmatpush.msra.mxu0 %v269
    %628 = vmatmul.f32.gmra.mxu0 %v551
    %v629 = vpop.f32.mrf.mxu0
    %v630 = vadd.f32 %v610, %v629
    %631 = vdwg.mxu0
    %v632 = vadd.f32 %v181, %v590
    %v633 = vadd.f32 %v222, %v630
    %v634 = vtanh.pop %v632
    %v635 = vtanh.pop %v633
    %636 = vmatpush.msra.mxu0 %v266
    %637 = vmatpush.msra.mxu0 %v264
    %638 = vmatpush.msra.mxu0 %v262
    %639 = vmatpush.msra.mxu0 %v260
    %640 = vmatpush.msra.mxu0 %v258
    %641 = vmatpush.msra.mxu0 %v256
    %642 = vmatpush.msra.mxu0 %v254
    %643 = vmatpush.msra.mxu0 %v252
    %644 = vmatpush.msra.mxu0 %v250
    %645 = vmatpush.msra.mxu0 %v248
    %646 = vmatpush.msra.mxu0 %v246
    %647 = vmatpush.msra.mxu0 %v244
    %648 = vmatpush.msra.mxu0 %v242
    %649 = vmatpush.msra.mxu0 %v240
    %650 = vmatpush.msra.mxu0 %v238
    %651 = vmatpush.msra.mxu0 %v236
    %652 = vmatmul.f32.gmra.mxu0 %v634
    %v653 = vpop.f32.mrf.mxu0
    %v654 = vadd.f32 0.0, %v653
    %655 = vdwg.mxu0
    %656 = vmatpush.msra.mxu0 %v298
    %657 = vmatpush.msra.mxu0 %v296
    %658 = vmatpush.msra.mxu0 %v294
    %659 = vmatpush.msra.mxu0 %v292
    %660 = vmatpush.msra.mxu0 %v290
    %661 = vmatpush.msra.mxu0 %v288
    %662 = vmatpush.msra.mxu0 %v286
    %663 = vmatpush.msra.mxu0 %v284
    %664 = vmatpush.msra.mxu0 %v282
    %665 = vmatpush.msra.mxu0 %v280
    %666 = vmatpush.msra.mxu0 %v278
    %667 = vmatpush.msra.mxu0 %v276
    %668 = vmatpush.msra.mxu0 %v274
    %669 = vmatpush.msra.mxu0 %v272
    %670 = vmatpush.msra.mxu0 %v270
    %671 = vmatpush.msra.mxu0 %v268
    %672 = vmatmul.f32.gmra.mxu0 %v635
    %v673 = vpop.f32.mrf.mxu0
    %v674 = vadd.f32 %v654, %v673
    %675 = vdwg.mxu0
    %676 = vmatpush.msra.mxu0 %v267
    %677 = vmatpush.msra.mxu0 %v265
    %678 = vmatpush.msra.mxu0 %v263
    %679 = vmatpush.msra.mxu0 %v261
    %680 = vmatpush.msra.mxu0 %v259
    %681 = vmatpush.msra.mxu0 %v257
    %682 = vmatpush.msra.mxu0 %v255
    %683 = vmatpush.msra.mxu0 %v253
    %684 = vmatpush.msra.mxu0 %v251
    %685 = vmatpush.msra.mxu0 %v249
    %686 = vmatpush.msra.mxu0 %v247
    %687 = vmatpush.msra.mxu0 %v245
    %688 = vmatpush.msra.mxu0 %v243
    %689 = vmatpush.msra.mxu0 %v241
    %690 = vmatpush.msra.mxu0 %v239
    %691 = vmatpush.msra.mxu0 %v237
    %692 = vmatmul.f32.gmra.mxu0 %v634
    %v693 = vpop.f32.mrf.mxu0
    %v694 = vadd.f32 0.0, %v693
    %695 = vdwg.mxu0
    %696 = vmatpush.msra.mxu0 %v299
    %697 = vmatpush.msra.mxu0 %v297
    %698 = vmatpush.msra.mxu0 %v295
    %699 = vmatpush.msra.mxu0 %v293
    %700 = vmatpush.msra.mxu0 %v291
    %701 = vmatpush.msra.mxu0 %v289
    %702 = vmatpush.msra.mxu0 %v287
    %703 = vmatpush.msra.mxu0 %v285
    %704 = vmatpush.msra.mxu0 %v283
    %705 = vmatpush.msra.mxu0 %v281
    %706 = vmatpush.msra.mxu0 %v279
    %707 = vmatpush.msra.mxu0 %v277
    %708 = vmatpush.msra.mxu0 %v275
    %709 = vmatpush.msra.mxu0 %v273
    %710 = vmatpush.msra.mxu0 %v271
    %711 = vmatpush.msra.mxu0 %v269
    %712 = vmatmul.f32.gmra.mxu0 %v635
    %v713 = vpop.f32.mrf.mxu0
    %v714 = vadd.f32 %v694, %v713
    %715 = vdwg.mxu0
    %v716 = vadd.f32 %v184, %v674
    %v717 = vadd.f32 %v225, %v714
    %v718 = vtanh.pop %v716
    %v719 = vtanh.pop %v717
    %720 = vmatpush.msra.mxu0 %v266
    %721 = vmatpush.msra.mxu0 %v264
    %722 = vmatpush.msra.mxu0 %v262
    %723 = vmatpush.msra.mxu0 %v260
    %724 = vmatpush.msra.mxu0 %v258
    %725 = vmatpush.msra.mxu0 %v256
    %726 = vmatpush.msra.mxu0 %v254
    %727 = vmatpush.msra.mxu0 %v252
    %728 = vmatpush.msra.mxu0 %v250
    %729 = vmatpush.msra.mxu0 %v248
    %730 = vmatpush.msra.mxu0 %v246
    %731 = vmatpush.msra.mxu0 %v244
    %732 = vmatpush.msra.mxu0 %v242
    %733 = vmatpush.msra.mxu0 %v240
    %734 = vmatpush.msra.mxu0 %v238
    %735 = vmatpush.msra.mxu0 %v236
    %736 = vmatmul.f32.gmra.mxu0 %v718
    %v737 = vpop.f32.mrf.mxu0
    %v738 = vadd.f32 0.0, %v737
    %739 = vdwg.mxu0
    %740 = vmatpush.msra.mxu0 %v298
    %741 = vmatpush.msra.mxu0 %v296
    %742 = vmatpush.msra.mxu0 %v294
    %743 = vmatpush.msra.mxu0 %v292
    %744 = vmatpush.msra.mxu0 %v290
    %745 = vmatpush.msra.mxu0 %v288
    %746 = vmatpush.msra.mxu0 %v286
    %747 = vmatpush.msra.mxu0 %v284
    %748 = vmatpush.msra.mxu0 %v282
    %749 = vmatpush.msra.mxu0 %v280
    %750 = vmatpush.msra.mxu0 %v278
    %751 = vmatpush.msra.mxu0 %v276
    %752 = vmatpush.msra.mxu0 %v274
    %753 = vmatpush.msra.mxu0 %v272
    %754 = vmatpush.msra.mxu0 %v270
    %755 = vmatpush.msra.mxu0 %v268
    %756 = vmatmul.f32.gmra.mxu0 %v719
    %v757 = vpop.f32.mrf.mxu0
    %v758 = vadd.f32 %v738, %v757
    %759 = vdwg.mxu0
    %760 = vmatpush.msra.mxu0 %v267
    %761 = vmatpush.msra.mxu0 %v265
    %762 = vmatpush.msra.mxu0 %v263
    %763 = vmatpush.msra.mxu0 %v261
    %764 = vmatpush.msra.mxu0 %v259
    %765 = vmatpush.msra.mxu0 %v257
    %766 = vmatpush.msra.mxu0 %v255
    %767 = vmatpush.msra.mxu0 %v253
    %768 = vmatpush.msra.mxu0 %v251
    %769 = vmatpush.msra.mxu0 %v249
    %770 = vmatpush.msra.mxu0 %v247
    %771 = vmatpush.msra.mxu0 %v245
    %772 = vmatpush.msra.mxu0 %v243
    %773 = vmatpush.msra.mxu0 %v241
    %774 = vmatpush.msra.mxu0 %v239
    %775 = vmatpush.msra.mxu0 %v237
    %776 = vmatmul.f32.gmra.mxu0 %v718
    %v777 = vpop.f32.mrf.mxu0
    %v778 = vadd.f32 0.0, %v777
    %779 = vdwg.mxu0
    %780 = vmatpush.msra.mxu0 %v299
    %781 = vmatpush.msra.mxu0 %v297
    %782 = vmatpush.msra.mxu0 %v295
    %783 = vmatpush.msra.mxu0 %v293
    %784 = vmatpush.msra.mxu0 %v291
    %785 = vmatpush.msra.mxu0 %v289
    %786 = vmatpush.msra.mxu0 %v287
    %787 = vmatpush.msra.mxu0 %v285
    %788 = vmatpush.msra.mxu0 %v283
    %789 = vmatpush.msra.mxu0 %v281
    %790 = vmatpush.msra.mxu0 %v279
    %791 = vmatpush.msra.mxu0 %v277
    %792 = vmatpush.msra.mxu0 %v275
    %793 = vmatpush.msra.mxu0 %v273
    %794 = vmatpush.msra.mxu0 %v271
    %795 = vmatpush.msra.mxu0 %v269
    %796 = vmatmul.f32.gmra.mxu0 %v719
    %v797 = vpop.f32.mrf.mxu0
    %v798 = vadd.f32 %v778, %v797
    %799 = vdwg.mxu0
    %v800 = vadd.f32 %v187, %v758
    %v801 = vadd.f32 %v228, %v798
    %v802 = vtanh.pop %v800
    %v803 = vtanh.pop %v801
    %804 = vmatpush.msra.mxu0 %v266
    %805 = vmatpush.msra.mxu0 %v264
    %806 = vmatpush.msra.mxu0 %v262
    %807 = vmatpush.msra.mxu0 %v260
    %808 = vmatpush.msra.mxu0 %v258
    %809 = vmatpush.msra.mxu0 %v256
    %810 = vmatpush.msra.mxu0 %v254
    %811 = vmatpush.msra.mxu0 %v252
    %812 = vmatpush.msra.mxu0 %v250
    %813 = vmatpush.msra.mxu0 %v248
    %814 = vmatpush.msra.mxu0 %v246
    %815 = vmatpush.msra.mxu0 %v244
    %816 = vmatpush.msra.mxu0 %v242
    %817 = vmatpush.msra.mxu0 %v240
    %818 = vmatpush.msra.mxu0 %v238
    %819 = vmatpush.msra.mxu0 %v236
    %820 = vmatmul.f32.gmra.mxu0 %v802
    %v821 = vpop.f32.mrf.mxu0
    %v822 = vadd.f32 0.0, %v821
    %823 = vdwg.mxu0
    %824 = vmatpush.msra.mxu0 %v298
    %825 = vmatpush.msra.mxu0 %v296
    %826 = vmatpush.msra.mxu0 %v294
    %827 = vmatpush.msra.mxu0 %v292
    %828 = vmatpush.msra.mxu0 %v290
    %829 = vmatpush.msra.mxu0 %v288
    %830 = vmatpush.msra.mxu0 %v286
    %831 = vmatpush.msra.mxu0 %v284
    %832 = vmatpush.msra.mxu0 %v282
    %833 = vmatpush.msra.mxu0 %v280
    %834 = vmatpush.msra.mxu0 %v278
    %835 = vmatpush.msra.mxu0 %v276
    %836 = vmatpush.msra.mxu0 %v274
    %837 = vmatpush.msra.mxu0 %v272
    %838 = vmatpush.msra.mxu0 %v270
    %839 = vmatpush.msra.mxu0 %v268
    %840 = vmatmul.f32.gmra.mxu0 %v803
    %v841 = vpop.f32.mrf.mxu0
    %v842 = vadd.f32 %v822, %v841
    %843 = vdwg.mxu0
    %844 = vmatpush.msra.mxu0 %v267
    %845 = vmatpush.msra.mxu0 %v265
    %846 = vmatpush.msra.mxu0 %v263
    %847 = vmatpush.msra.mxu0 %v261
    %848 = vmatpush.msra.mxu0 %v259
    %849 = vmatpush.msra.mxu0 %v257
    %850 = vmatpush.msra.mxu0 %v255
    %851 = vmatpush.msra.mxu0 %v253
    %852 = vmatpush.msra.mxu0 %v251
    %853 = vmatpush.msra.mxu0 %v249
    %854 = vmatpush.msra.mxu0 %v247
    %855 = vmatpush.msra.mxu0 %v245
    %856 = vmatpush.msra.mxu0 %v243
    %857 = vmatpush.msra.mxu0 %v241
    %858 = vmatpush.msra.mxu0 %v239
    %859 = vmatpush.msra.mxu0 %v237
    %860 = vmatmul.f32.gmra.mxu0 %v802
    %v861 = vpop.f32.mrf.mxu0
    %v862 = vadd.f32 0.0, %v861
    %863 = vdwg.mxu0
    %864 = vmatpush.msra.mxu0 %v299
    %865 = vmatpush.msra.mxu0 %v297
    %866 = vmatpush.msra.mxu0 %v295
    %867 = vmatpush.msra.mxu0 %v293
    %868 = vmatpush.msra.mxu0 %v291
    %869 = vmatpush.msra.mxu0 %v289
    %870 = vmatpush.msra.mxu0 %v287
    %871 = vmatpush.msra.mxu0 %v285
    %872 = vmatpush.msra.mxu0 %v283
    %873 = vmatpush.msra.mxu0 %v281
    %874 = vmatpush.msra.mxu0 %v279
    %875 = vmatpush.msra.mxu0 %v277
    %876 = vmatpush.msra.mxu0 %v275
    %877 = vmatpush.msra.mxu0 %v273
    %878 = vmatpush.msra.mxu0 %v271
    %879 = vmatpush.msra.mxu0 %v269
    %880 = vmatmul.f32.gmra.mxu0 %v803
    %v881 = vpop.f32.mrf.mxu0
    %v882 = vadd.f32 %v862, %v881
    %883 = vdwg.mxu0
    %v884 = vadd.f32 %v190, %v842
    %v885 = vadd.f32 %v231, %v882
    %v886 = vtanh.pop %v884
    %v887 = vtanh.pop %v885
    %888 = vmatpush.msra.mxu0 %v266
    %889 = vmatpush.msra.mxu0 %v264
    %890 = vmatpush.msra.mxu0 %v262
    %891 = vmatpush.msra.mxu0 %v260
    %892 = vmatpush.msra.mxu0 %v258
    %893 = vmatpush.msra.mxu0 %v256
    %894 = vmatpush.msra.mxu0 %v254
    %895 = vmatpush.msra.mxu0 %v252
    %896 = vmatpush.msra.mxu0 %v250
    %897 = vmatpush.msra.mxu0 %v248
    %898 = vmatpush.msra.mxu0 %v246
    %899 = vmatpush.msra.mxu0 %v244
    %900 = vmatpush.msra.mxu0 %v242
    %901 = vmatpush.msra.mxu0 %v240
    %902 = vmatpush.msra.mxu0 %v238
    %903 = vmatpush.msra.mxu0 %v236
    %904 = vmatmul.f32.gmra.mxu0 %v886
    %v905 = vpop.f32.mrf.mxu0
    %v906 = vadd.f32 0.0, %v905
    %907 = vdwg.mxu0
    %908 = vmatpush.msra.mxu0 %v298
    %909 = vmatpush.msra.mxu0 %v296
    %910 = vmatpush.msra.mxu0 %v294
    %911 = vmatpush.msra.mxu0 %v292
    %912 = vmatpush.msra.mxu0 %v290
    %913 = vmatpush.msra.mxu0 %v288
    %914 = vmatpush.msra.mxu0 %v286
    %915 = vmatpush.msra.mxu0 %v284
    %916 = vmatpush.msra.mxu0 %v282
    %917 = vmatpush.msra.mxu0 %v280
    %918 = vmatpush.msra.mxu0 %v278
    %919 = vmatpush.msra.mxu0 %v276
    %920 = vmatpush.msra.mxu0 %v274
    %921 = vmatpush.msra.mxu0 %v272
    %922 = vmatpush.msra.mxu0 %v270
    %923 = vmatpush.msra.mxu0 %v268
    %924 = vmatmul.f32.gmra.mxu0 %v887
    %v925 = vpop.f32.mrf.mxu0
    %v926 = vadd.f32 %v906, %v925
    %927 = vdwg.mxu0
    %928 = vmatpush.msra.mxu0 %v267
    %929 = vmatpush.msra.mxu0 %v265
    %930 = vmatpush.msra.mxu0 %v263
    %931 = vmatpush.msra.mxu0 %v261
    %932 = vmatpush.msra.mxu0 %v259
    %933 = vmatpush.msra.mxu0 %v257
    %934 = vmatpush.msra.mxu0 %v255
    %935 = vmatpush.msra.mxu0 %v253
    %936 = vmatpush.msra.mxu0 %v251
    %937 = vmatpush.msra.mxu0 %v249
    %938 = vmatpush.msra.mxu0 %v247
    %939 = vmatpush.msra.mxu0 %v245
    %940 = vmatpush.msra.mxu0 %v243
    %941 = vmatpush.msra.mxu0 %v241
    %942 = vmatpush.msra.mxu0 %v239
    %943 = vmatpush.msra.mxu0 %v237
    %944 = vmatmul.f32.gmra.mxu0 %v886
    %v945 = vpop.f32.mrf.mxu0
    %v946 = vadd.f32 0.0, %v945
    %947 = vdwg.mxu0
    %948 = vmatpush.msra.mxu0 %v299
    %949 = vmatpush.msra.mxu0 %v297
    %950 = vmatpush.msra.mxu0 %v295
    %951 = vmatpush.msra.mxu0 %v293
    %952 = vmatpush.msra.mxu0 %v291
    %953 = vmatpush.msra.mxu0 %v289
    %954 = vmatpush.msra.mxu0 %v287
    %955 = vmatpush.msra.mxu0 %v285
    %956 = vmatpush.msra.mxu0 %v283
    %957 = vmatpush.msra.mxu0 %v281
    %958 = vmatpush.msra.mxu0 %v279
    %959 = vmatpush.msra.mxu0 %v277
    %960 = vmatpush.msra.mxu0 %v275
    %961 = vmatpush.msra.mxu0 %v273
    %962 = vmatpush.msra.mxu0 %v271
    %963 = vmatpush.msra.mxu0 %v269
    %964 = vmatmul.f32.gmra.mxu0 %v887
    %v965 = vpop.f32.mrf.mxu0
    %v966 = vadd.f32 %v946, %v965
    %967 = vdwg.mxu0
    %v968 = vadd.f32 %v193, %v926
    %v969 = vadd.f32 %v234, %v966
    %v970 = vtanh.pop %v968
    %v971 = vtanh.pop %v969
    %v972 = vld [vmem:[#allocation8] sm:$0xff]
    %v973 = vld [vmem:[#allocation8 + $0x8] sm:$0xff]
    %v974 = vld [vmem:[#allocation8 + $0x10] sm:$0xff]
    %v975 = vld [vmem:[#allocation8 + $0x18] sm:$0xff]
    %v976 = vld [vmem:[#allocation8 + $0x20] sm:$0xff]
    %v977 = vld [vmem:[#allocation8 + $0x28] sm:$0xff]
    %v978 = vld [vmem:[#allocation8 + $0x30] sm:$0xff]
    %v979 = vld [vmem:[#allocation8 + $0x38] sm:$0xff]
    %v980 = vld [vmem:[#allocation8 + $0x40] sm:$0xff]
    %v981 = vld [vmem:[#allocation8 + $0x48] sm:$0xff]
    %v982 = vld [vmem:[#allocation8 + $0x50] sm:$0xff]
    %v983 = vld [vmem:[#allocation8 + $0x58] sm:$0xff]
    %v984 = vld [vmem:[#allocation8 + $0x60] sm:$0xff]
    %v985 = vld [vmem:[#allocation8 + $0x68] sm:$0xff]
    %v986 = vld [vmem:[#allocation8 + $0x70] sm:$0xff]
    %v987 = vld [vmem:[#allocation8 + $0x78] sm:$0xff]
    %v988 = vld [vmem:[#allocation8 + $0x80] sm:$0xff]
    %v989 = vld [vmem:[#allocation8 + $0x88] sm:$0xff]
    %v990 = vld [vmem:[#allocation8 + $0x90] sm:$0xff]
    %v991 = vld [vmem:[#allocation8 + $0x98] sm:$0xff]
    %v992 = vld [vmem:[#allocation8 + $0xa0] sm:$0xff]
    %v993 = vld [vmem:[#allocation8 + $0xa8] sm:$0xff]
    %v994 = vld [vmem:[#allocation8 + $0xb0] sm:$0xff]
    %v995 = vld [vmem:[#allocation8 + $0xb8] sm:$0xff]
    %v996 = vld [vmem:[#allocation8 + $0xc0] sm:$0xff]
    %v997 = vld [vmem:[#allocation8 + $0xc8] sm:$0xff]
    %v998 = vld [vmem:[#allocation8 + $0xd0] sm:$0xff]
    %v999 = vld [vmem:[#allocation8 + $0xd8] sm:$0xff]
    %v1000 = vld [vmem:[#allocation8 + $0xe0] sm:$0xff]
    %v1001 = vld [vmem:[#allocation8 + $0xe8] sm:$0xff]
    %v1002 = vld [vmem:[#allocation8 + $0xf0] sm:$0xff]
    %v1003 = vld [vmem:[#allocation8 + $0xf8] sm:$0xff]
    %v1004 = vld [vmem:[%s5] sm:$0x1]
    %v1006 = vperm.slane %v1004, 0
    %1008 = vmatpush.msra.mxu0 %v987
    %1009 = vmatpush.msra.mxu0 %v986
    %1010 = vmatpush.msra.mxu0 %v985
    %1011 = vmatpush.msra.mxu0 %v984
    %1012 = vmatpush.msra.mxu0 %v983
    %1013 = vmatpush.msra.mxu0 %v982
    %1014 = vmatpush.msra.mxu0 %v981
    %1015 = vmatpush.msra.mxu0 %v980
    %1016 = vmatpush.msra.mxu0 %v979
    %1017 = vmatpush.msra.mxu0 %v978
    %1018 = vmatpush.msra.mxu0 %v977
    %1019 = vmatpush.msra.mxu0 %v976
    %1020 = vmatpush.msra.mxu0 %v975
    %1021 = vmatpush.msra.mxu0 %v974
    %1022 = vmatpush.msra.mxu0 %v973
    %1023 = vmatpush.msra.mxu0 %v972
    %1024 = vmatmul.f32.gmra.mxu0 %v970
    %v1025 = vpop.f32.mrf.mxu0
    %v1026 = vadd.f32 %v1006, %v1025
    %1027 = vdwg.mxu0
    %1028 = vmatpush.msra.mxu0 %v1003
    %1029 = vmatpush.msra.mxu0 %v1002
    %1030 = vmatpush.msra.mxu0 %v1001
    %1031 = vmatpush.msra.mxu0 %v1000
    %1032 = vmatpush.msra.mxu0 %v999
    %1033 = vmatpush.msra.mxu0 %v998
    %1034 = vmatpush.msra.mxu0 %v997
    %1035 = vmatpush.msra.mxu0 %v996
    %1036 = vmatpush.msra.mxu0 %v995
    %1037 = vmatpush.msra.mxu0 %v994
    %1038 = vmatpush.msra.mxu0 %v993
    %1039 = vmatpush.msra.mxu0 %v992
    %1040 = vmatpush.msra.mxu0 %v991
    %1041 = vmatpush.msra.mxu0 %v990
    %1042 = vmatpush.msra.mxu0 %v989
    %1043 = vmatpush.msra.mxu0 %v988
    %1044 = vmatmul.f32.gmra.mxu0 %v971
    %v1045 = vpop.f32.mrf.mxu0
    %v1046 = vadd.f32 %v1026, %v1045
    %1047 = vdwg.mxu0
    %v1048 = vmax.f32 %v1046, 0.0
    %v1049 = vld [vmem:[#allocation10] sm:$0xff]
    %v1050 = vld [vmem:[#allocation10 + $0x8] sm:$0xff]
    %v1051 = vld [vmem:[#allocation10 + $0x10] sm:$0xff]
    %v1052 = vld [vmem:[#allocation10 + $0x18] sm:$0xff]
    %v1053 = vld [vmem:[#allocation10 + $0x20] sm:$0xff]
    %v1054 = vld [vmem:[#allocation10 + $0x28] sm:$0xff]
    %v1055 = vld [vmem:[#allocation10 + $0x30] sm:$0xff]
    %v1056 = vld [vmem:[#allocation10 + $0x38] sm:$0xff]
    %v1057 = vld [vmem:[#allocation10 + $0x40] sm:$0xff]
    %v1058 = vld [vmem:[#allocation10 + $0x48] sm:$0xff]
    %v1059 = vld [vmem:[#allocation10 + $0x50] sm:$0xff]
    %v1060 = vld [vmem:[#allocation10 + $0x58] sm:$0xff]
    %v1061 = vld [vmem:[#allocation10 + $0x60] sm:$0xff]
    %v1062 = vld [vmem:[#allocation10 + $0x68] sm:$0xff]
    %v1063 = vld [vmem:[#allocation10 + $0x70] sm:$0xff]
    %v1064 = vld [vmem:[#allocation10 + $0x78] sm:$0xff]
    %v1065 = vld [vmem:[%s7] sm:$0x1]
    %v1067 = vperm.slane %v1065, 0
    %1069 = vmatpush.msra.mxu0 %v1064
    %1070 = vmatpush.msra.mxu0 %v1063
    %1071 = vmatpush.msra.mxu0 %v1062
    %1072 = vmatpush.msra.mxu0 %v1061
    %1073 = vmatpush.msra.mxu0 %v1060
    %1074 = vmatpush.msra.mxu0 %v1059
    %1075 = vmatpush.msra.mxu0 %v1058
    %1076 = vmatpush.msra.mxu0 %v1057
    %1077 = vmatpush.msra.mxu0 %v1056
    %1078 = vmatpush.msra.mxu0 %v1055
    %1079 = vmatpush.msra.mxu0 %v1054
    %1080 = vmatpush.msra.mxu0 %v1053
    %1081 = vmatpush.msra.mxu0 %v1052
    %1082 = vmatpush.msra.mxu0 %v1051
    %1083 = vmatpush.msra.mxu0 %v1050
    %1084 = vmatpush.msra.mxu0 %v1049
    %1085 = vmatmul.f32.gmra.mxu0 %v1048
    %v1086 = vpop.f32.mrf.mxu0
    %v1087 = vadd.f32 %v1067, %v1086
    %1088 = vdwg.mxu0
    %1089 = vmax.xlane.f32.xlu0 %v1087
    %v1090 = vpop.xlane.xlu0 %1089
    %v1091 = vsub.f32 %v1087, %v1090
    %v1092 = vmul.f32 %v1091, 1.442695
    %v1093 = vpow.pop %v1092
    %1094 = vadd.xlane.f32.xlu0 %v1093
    %v1095 = vpop.xlane.xlu0 %1094
    %v1096 = vrcp.pop %v1095
    %v1097 = vmul.f32 %v1095, %v1096
    %v1098 = vsub.f32 1.0, %v1097
    %v1099 = vmul.f32 %v1096, %v1098
    %v1100 = vadd.f32 %v1096, %v1099
    %vm1101 = vweird.f32 %v1095
    %vm1102 = vweird.f32 %v1096
    %vm1103 = vmor %vm1101, %vm1102
    %v1104 = vsel %vm1103, %v1096, %v1100
    %v1105 = vand.u32 2147483647, %v1095
    %vm1106 = vcmp.eq.f32.partialorder %v1105, 8.507059e+37
    %v1107 = vand.u32 %v1095, 2147483648
    %v1108 = vor.u32 1.1754944e-38, %v1107
    %v1109 = vsel %vm1106, %v1108, %v1104
    %v1110 = vmul.f32 %v1093, %v1109
    %1111 = vst [vmem:[#allocation11] sm:$0xff] %v1110
    // Predicated region
    $region54: #{tpu_custom_call.1} parent=1 // pred_check
      _
    $region55: #{tpu_custom_call.1} parent=1 // pred_check_branch
      %1113 = sbr.rel (0) target = $region57
    $region56: #{tpu_custom_call.1} parent=1 // pred_region
      %1115 = vsyncadd [#allocation4], 0
      %s1117 = sshll.u32 [#allocation11], 4
      %s1118 = int_to_ptr.vmem [resolvable:$true] %s1117
      %s1119 = sshll.u32 %s8, 4
      %s1120 = int_to_ptr.hbm [resolvable:$true] %s1119
      %1122 = dma.vmem_to_hbm [thread:$0]  %s1118, 128, %s1120, [#allocation4]
    $region57: #{tpu_custom_call.1} parent=1 // pred_fallthru
      _
    // Predicated region
    $region58: #{tpu_custom_call.1} parent=1 // pred_check
      _
    $region59: #{tpu_custom_call.1} parent=1 // pred_check_branch
      %1124 = sbr.rel (0) target = $region61
    $region60: #{tpu_custom_call.1} parent=1 // pred_region
      %1126 = dma.done [#allocation4], 128
    $region61: #{tpu_custom_call.1} parent=1 // pred_fallthru
      _
    %1127 = vsyncpa [#allocation3], 1
    %1128 = vsyncpa [#allocation6], 1
    %1129 = vsyncpa [#allocation9], 1
    %1130 = vsyncpa [#allocation4], 1

</llo_original>
